<compile_context>
chip_gen: v7x
topology: tpu7x:2x2x1
jax: 0.10.0
libtpu: 0.0.40
codegen_flags: <defaults>
</compile_context>

<pallas_src>
import jax
import jax.numpy as jnp
from jax.experimental import pallas as pl
from jax.experimental.pallas import tpu as pltpu


def _mlp_kernel(x_ref, w1_ref, b1_ref, w2_ref, b2_ref, o_ref):
    """Fused  sigmoid(x @ W1t + b1) @ W2t + b2  on one VMEM-resident block.

    x_ref : (B, IN)      w1_ref: (IN, H)   b1_ref: (1, H)
    w2_ref: (H, O)       b2_ref: (1, O)    o_ref : (B, O)
    """
    x = x_ref[...]

    # z1 = x @ W1.T + b1   (weights pre-transposed once outside the per-call path).
    z1 = jnp.dot(x, w1_ref[...], preferred_element_type=jnp.float32) + b1_ref[...]

    # Sigmoid runs on the EUP slot; essentially free next to the matmuls.
    p1 = jax.nn.sigmoid(z1)

    # out = p1 @ W2.T + b2
    out = jnp.dot(p1, w2_ref[...], preferred_element_type=jnp.float32) + b2_ref[...]

    o_ref[...] = out.astype(o_ref.dtype)


def prepare_params(w1, b1, w2, b2):
    """One-time parameter prep, hoisted out of the per-call forward.

    Takes nn.Linear-convention tensors:
        w1: (n_hidden, in_features)   b1: (n_hidden,)
        w2: (out_features, n_hidden)  b2: (out_features,)
    Returns MXU-friendly (K, N) weights and (1, N) biases.
    """
    return w1.T, b1.reshape(1, -1), w2.T, b2.reshape(1, -1)


@jax.jit
def sigmoid_class1_forward(x, w1_t, b1_row, w2_t, b2_row):
    """Forward pass of Sigmoid_class1 with BN_model=None.

    x     : (batch, in_features)        float32
    w1_t  : (in_features, n_hidden)     float32  (prepared by prepare_params)
    b1_row: (1, n_hidden)               float32
    w2_t  : (n_hidden, out_features)    float32
    b2_row: (1, out_features)           float32
    returns (batch, out_features)       float32
    """
    batch = x.shape[0]
    out_features = w2_t.shape[1]

    # No grid: the whole (tiny) problem is one VMEM-resident invocation.  Full-array
    # blocks waive the (8,128) divisibility rule, so no padding / slicing is needed.
    vmem_spec = pl.BlockSpec(memory_space=pltpu.MemorySpace.VMEM)

    return pl.pallas_call(
        _mlp_kernel,
        out_shape=jax.ShapeDtypeStruct((batch, out_features), x.dtype),
        in_specs=[vmem_spec] * 5,
        out_specs=vmem_spec,
    )(x, w1_t, b1_row, w2_t, b2_row)


if __name__ == "__main__":
    in_features = 2
    n_hidden = 4
    out_features = 1
    batch = 8

    key = jax.random.PRNGKey(0)
    kx, kw1, kb1, kw2, kb2 = jax.random.split(key, 5)

    # Deterministic synthetic parameters (nn.Linear default init range
    # U(-1/sqrt(fan_in), 1/sqrt(fan_in)); we just need determinism).
    bound1 = 1.0 / jnp.sqrt(jnp.float32(in_features))
    bound2 = 1.0 / jnp.sqrt(jnp.float32(n_hidden))
    w1 = jax.random.uniform(kw1, (n_hidden, in_features), jnp.float32, -bound1, bound1)
    b1 = jax.random.uniform(kb1, (n_hidden,), jnp.float32, -bound1, bound1)
    w2 = jax.random.uniform(kw2, (out_features, n_hidden), jnp.float32, -bound2, bound2)
    b2 = jax.random.uniform(kb2, (out_features,), jnp.float32, -bound2, bound2)
    x = jax.random.normal(kx, (batch, in_features), dtype=jnp.float32)

    # Weight prep happens once, outside the per-call path (weights are constants
    # across inference calls).
    w1_t, b1_row, w2_t, b2_row = prepare_params(w1, b1, w2, b2)

    out = sigmoid_class1_forward(x, w1_t, b1_row, w2_t, b2_row)
    out = jax.block_until_ready(out)

    # Pure-JAX reference with identical semantics to the PyTorch module (BN_model=None).
    ref = jax.nn.sigmoid(x @ w1.T + b1) @ w2.T + b2

    assert out.shape == (batch, out_features)
    assert jnp.allclose(out, ref, atol=1e-5, rtol=1e-5)

    print("KERNEL_OK")
</pallas_src>

<mosaic_0001>
module attributes {stable_mosaic.version = 11 : i64} {
  func.func @_mlp_kernel(%arg0: memref<8x2xf32, #tpu.memory_space<vmem>>, %arg1: memref<2x4xf32, #tpu.memory_space<vmem>>, %arg2: memref<1x4xf32, #tpu.memory_space<vmem>>, %arg3: memref<4x1xf32, #tpu.memory_space<vmem>>, %arg4: memref<1x1xf32, #tpu.memory_space<vmem>>, %arg5: memref<8x1xf32, #tpu.memory_space<vmem>>) attributes {dimension_semantics = [], scalar_prefetch = 0 : i64, scratch_operands = 0 : i64, tpu.core_type = #tpu.core_type<tc>} {
    %c0 = arith.constant 0 : index
    %c0_0 = arith.constant 0 : index
    %0 = vector.load %arg0[%c0, %c0_0] : memref<8x2xf32, #tpu.memory_space<vmem>>, vector<8x2xf32>
    %c0_1 = arith.constant 0 : index
    %c0_2 = arith.constant 0 : index
    %1 = vector.load %arg1[%c0_1, %c0_2] : memref<2x4xf32, #tpu.memory_space<vmem>>, vector<2x4xf32>
    %cst = arith.constant dense<0.000000e+00> : vector<8x4xf32>
    %2 = tpu.matmul %0, %1, %cst {dimension_numbers = #tpu.dot_dimension_numbers<[1], [0], [0], [1], [0, 0, 1, 1], [], []>} : vector<8x2xf32>, vector<2x4xf32>, vector<8x4xf32> -> vector<8x4xf32>
    %c0_3 = arith.constant 0 : index
    %c0_4 = arith.constant 0 : index
    %3 = vector.load %arg2[%c0_3, %c0_4] : memref<1x4xf32, #tpu.memory_space<vmem>>, vector<1x4xf32>
    %4 = vector.broadcast %3 : vector<1x4xf32> to vector<8x4xf32>
    %5 = arith.addf %2, %4 : vector<8x4xf32>
    %6 = arith.negf %5 : vector<8x4xf32>
    %7 = math.exp %6 : vector<8x4xf32>
    %cst_5 = arith.constant 1.000000e+00 : f32
    %8 = vector.broadcast %cst_5 : f32 to vector<8x4xf32>
    %9 = arith.addf %8, %7 : vector<8x4xf32>
    %10 = arith.divf %8, %9 : vector<8x4xf32>
    %c0_6 = arith.constant 0 : index
    %c0_7 = arith.constant 0 : index
    %11 = vector.load %arg3[%c0_6, %c0_7] : memref<4x1xf32, #tpu.memory_space<vmem>>, vector<4x1xf32>
    %cst_8 = arith.constant dense<0.000000e+00> : vector<8x1xf32>
    %12 = tpu.matmul %10, %11, %cst_8 {dimension_numbers = #tpu.dot_dimension_numbers<[1], [0], [0], [1], [0, 0, 1, 1], [], []>} : vector<8x4xf32>, vector<4x1xf32>, vector<8x1xf32> -> vector<8x1xf32>
    %c0_9 = arith.constant 0 : index
    %c0_10 = arith.constant 0 : index
    %13 = vector.load %arg4[%c0_9, %c0_10] : memref<1x1xf32, #tpu.memory_space<vmem>>, vector<1x1xf32>
    %14 = vector.broadcast %13 : vector<1x1xf32> to vector<8x1xf32>
    %15 = arith.addf %12, %14 : vector<8x1xf32>
    %c0_11 = arith.constant 0 : index
    %c0_12 = arith.constant 0 : index
    %16 = vector.load %arg5[%c0_11, %c0_12] : memref<8x1xf32, #tpu.memory_space<vmem>>, vector<8x1xf32>
    tpu.vector_store %arg5[%c0_11, %c0_12], %15 {strides = array<i32>} : memref<8x1xf32, #tpu.memory_space<vmem>>, vector<8x1xf32>,
    return
  }
}

</mosaic_0001>

<llo_original>
// kernel: sigmoid_class1_forward.1
$region0: #{sigmoid_class1_forward.1}
  #allocation0 [shape = 'u32[]', space=smem, size = 0x4, offset = 0x4, fixed_abs, tag = 'smem constant byte address 0x4 - core index']
  #allocation1 [shape = 'u32[144,128]{1,0:T(1,128)}', space=vmem, size = 0x12000, scoped, tag = 'internal scratch']
  #allocation2 [shape = 'f32[1,1]{1,0:T(1,128)S(1)}', space=vmem, size = 0x200, scoped, tag = 'scoped memory for sigmoid_class1_forward.1']
  %s0 = inlined_call_operand.vmem [shape: f32[8,2], index: 0, kind: input, shape index: {}]
  %s1 = inlined_call_operand.vmem [shape: f32[2,4], index: 1, kind: input, shape index: {}]
  %s2 = inlined_call_operand.vmem [shape: f32[1,4], index: 2, kind: input, shape index: {}]
  %s3 = inlined_call_operand.vmem [shape: f32[4,1], index: 3, kind: input, shape index: {}]
  %s4 = inlined_call_operand.<no memory space> [shape: f32[1,1], index: 4, kind: input, shape index: {}]
  %s5 = inlined_call_operand.vmem [shape: f32[8,1], index: 5, kind: output, shape index: {}]
  %s6 = sld [smem:[#allocation0]]
  $region30: #{sigmoid_class1_forward.1} parent=0
    _
  %s8 = ssub.s32 1, %s6
  %s9 = scalar_select 0, %s8, %s6
  %v10 = vstv %s4
  %11 = vst [vmem:[#allocation2] sm:$0x1] %v10
  // Predicated region
  $region2: #{sigmoid_class1_forward.1} parent=0 // pred_check
    _
  $region3: #{sigmoid_class1_forward.1} parent=0 // pred_check_branch
    %13 = sbr.rel (0) target = $region5
  $region4: #{sigmoid_class1_forward.1} parent=0 // pred_region
    _
  $region5: #{sigmoid_class1_forward.1} parent=0 // pred_fallthru
    _
  // Predicated region
  $region6: #{sigmoid_class1_forward.1} parent=0 // pred_check
    _
  $region7: #{sigmoid_class1_forward.1} parent=0 // pred_check_branch
    %15 = sbr.rel (0) target = $region9
  $region8: #{sigmoid_class1_forward.1} parent=0 // pred_region
    _
  $region9: #{sigmoid_class1_forward.1} parent=0 // pred_fallthru
    _
  // Predicated region
  $region10: #{sigmoid_class1_forward.1} parent=0 // pred_check
    _
  $region11: #{sigmoid_class1_forward.1} parent=0 // pred_check_branch
    %17 = sbr.rel (0) target = $region13
  $region12: #{sigmoid_class1_forward.1} parent=0 // pred_region
    _
  $region13: #{sigmoid_class1_forward.1} parent=0 // pred_fallthru
    _
  // Predicated region
  $region14: #{sigmoid_class1_forward.1} parent=0 // pred_check
    _
  $region15: #{sigmoid_class1_forward.1} parent=0 // pred_check_branch
    %19 = sbr.rel (0) target = $region17
  $region16: #{sigmoid_class1_forward.1} parent=0 // pred_region
    _
  $region17: #{sigmoid_class1_forward.1} parent=0 // pred_fallthru
    _
  // Predicated region
  $region18: #{sigmoid_class1_forward.1} parent=0 // pred_check
    _
  $region19: #{sigmoid_class1_forward.1} parent=0 // pred_check_branch
    %21 = sbr.rel (0) target = $region21
  $region20: #{sigmoid_class1_forward.1} parent=0 // pred_region
    _
  $region21: #{sigmoid_class1_forward.1} parent=0 // pred_fallthru
    _
  %v22 = vld [vmem:[%s0] sm:$0xff]
  %v23 = vld [vmem:[%s1] sm:$0x3]
  %v24 = vld [vmem:[%s2] sm:$0x1]
  %v26 = vlaneseq
  %v27 = vshrl.u32 %v26, 7
  %v28 = vsub.s32 0, %v27
  %v29 = vrot.slane %v24, %v28
  %vm31 = vcmask 15360
  %v33 = vsel %vm31, %v22, 0
  %vm35 = vcmask 1041408
  %v37 = vsel %vm35, %v23, 0
  %39 = vmatprep.subr.mxu0 0.0
  %40 = vmatpush1.msra.mxu0 %v37
  %41 = vmatprep.subr.mxu0 0.0
  %42 = vmatpush1.msra.mxu0 0.0
  %43 = vmatprep.subr.mxu0 0.0
  %44 = vmatpush1.msra.mxu0 0.0
  %45 = vmatprep.subr.mxu0 0.0
  %46 = vmatpush1.msra.mxu0 0.0
  %47 = vmatprep.subr.mxu0 0.0
  %48 = vmatpush1.msra.mxu0 0.0
  %49 = vmatprep.subr.mxu0 0.0
  %50 = vmatpush1.msra.mxu0 0.0
  %51 = vmatprep.subr.mxu0 0.0
  %52 = vmatpush1.msra.mxu0 0.0
  %53 = vmatprep.subr.mxu0 0.0
  %54 = vmatpush1.msra.mxu0 0.0
  %55 = vmatprep.subr.mxu0 0.0
  %56 = vmatpush1.msra.mxu0 0.0
  %57 = vmatprep.subr.mxu0 0.0
  %58 = vmatpush1.msra.mxu0 0.0
  %59 = vmatprep.subr.mxu0 0.0
  %60 = vmatpush1.msra.mxu0 0.0
  %61 = vmatprep.subr.mxu0 0.0
  %62 = vmatpush1.msra.mxu0 0.0
  %63 = vmatprep.subr.mxu0 0.0
  %64 = vmatpush1.msra.mxu0 0.0
  %65 = vmatprep.subr.mxu0 0.0
  %66 = vmatpush1.msra.mxu0 0.0
  %67 = vmatprep.subr.mxu0 0.0
  %68 = vmatpush1.msra.mxu0 0.0
  %69 = vmatprep.subr.mxu0 0.0
  %70 = vmatpush1.msra.mxu0 0.0
  %71 = vmatprep.subr.mxu0 0.0
  %72 = vmatpush1.msra.mxu0 0.0
  %73 = vmatprep.subr.mxu0 0.0
  %74 = vmatpush1.msra.mxu0 0.0
  %75 = vmatprep.subr.mxu0 0.0
  %76 = vmatpush1.msra.mxu0 0.0
  %77 = vmatprep.subr.mxu0 0.0
  %78 = vmatpush1.msra.mxu0 0.0
  %79 = vmatprep.subr.mxu0 0.0
  %80 = vmatpush1.msra.mxu0 0.0
  %81 = vmatprep.subr.mxu0 0.0
  %82 = vmatpush1.msra.mxu0 0.0
  %83 = vmatprep.subr.mxu0 0.0
  %84 = vmatpush1.msra.mxu0 0.0
  %85 = vmatprep.subr.mxu0 0.0
  %86 = vmatpush1.msra.mxu0 0.0
  %87 = vmatprep.subr.mxu0 0.0
  %88 = vmatpush1.msra.mxu0 0.0
  %89 = vmatprep.subr.mxu0 0.0
  %90 = vmatpush1.msra.mxu0 0.0
  %91 = vmatprep.subr.mxu0 0.0
  %92 = vmatpush1.msra.mxu0 0.0
  %93 = vmatprep.subr.mxu0 0.0
  %94 = vmatpush1.msra.mxu0 0.0
  %95 = vmatprep.subr.mxu0 0.0
  %96 = vmatpush1.msra.mxu0 0.0
  %97 = vmatprep.subr.mxu0 0.0
  %98 = vmatpush1.msra.mxu0 0.0
  %99 = vmatprep.subr.mxu0 0.0
  %100 = vmatpush1.msra.mxu0 0.0
  %101 = vmatprep.subr.mxu0 0.0
  %102 = vmatpush1.msra.mxu0 0.0
  %103 = vmatprep.mubr.f32.mxu0 0.0
  %104 = vmatmul.mubr.f32.gmra.mrb[0].mxu0 %v33
  %v105 = vpop.f32.mrb[0].mxu0
  %v106 = vadd.f32 %v29, %v105
  %v107 = vpop.f32.mrb[0].mxu0
  %108 = vdwg.mxu0
  %v109 = vxor.u32 %v106, 2147483648
  %v110 = vmul.f32 %v109, 1.442695
  %v111 = vpow.pop %v110
  %v112 = vadd.f32 %v111, 1.0
  %v113 = vrcp.pop %v112
  %v114 = vmul.f32 1.0, %v113
  %v115 = vld [vmem:[%s3] sm:$0xf]
  %v116 = vld [vmem:[#allocation2] sm:$0x1]
  %v118 = vlaneseq
  %v119 = vshrl.u32 %v118, 7
  %v120 = vsub.s32 0, %v119
  %v121 = vrot.slane %v116, %v120
  %vm123 = vcmask 31744
  %v125 = vsel %vm123, %v114, 0
  %vm127 = vcmask 1043456
  %v129 = vsel %vm127, %v115, 0
  %131 = vmatprep.subr.mxu0 0.0
  %132 = vmatpush1.msra.mxu0 %v129
  %133 = vmatprep.subr.mxu0 0.0
  %134 = vmatpush1.msra.mxu0 0.0
  %135 = vmatprep.subr.mxu0 0.0
  %136 = vmatpush1.msra.mxu0 0.0
  %137 = vmatprep.subr.mxu0 0.0
  %138 = vmatpush1.msra.mxu0 0.0
  %139 = vmatprep.subr.mxu0 0.0
  %140 = vmatpush1.msra.mxu0 0.0
  %141 = vmatprep.subr.mxu0 0.0
  %142 = vmatpush1.msra.mxu0 0.0
  %143 = vmatprep.subr.mxu0 0.0
  %144 = vmatpush1.msra.mxu0 0.0
  %145 = vmatprep.subr.mxu0 0.0
  %146 = vmatpush1.msra.mxu0 0.0
  %147 = vmatprep.subr.mxu0 0.0
  %148 = vmatpush1.msra.mxu0 0.0
  %149 = vmatprep.subr.mxu0 0.0
  %150 = vmatpush1.msra.mxu0 0.0
  %151 = vmatprep.subr.mxu0 0.0
  %152 = vmatpush1.msra.mxu0 0.0
  %153 = vmatprep.subr.mxu0 0.0
  %154 = vmatpush1.msra.mxu0 0.0
  %155 = vmatprep.subr.mxu0 0.0
  %156 = vmatpush1.msra.mxu0 0.0
  %157 = vmatprep.subr.mxu0 0.0
  %158 = vmatpush1.msra.mxu0 0.0
  %159 = vmatprep.subr.mxu0 0.0
  %160 = vmatpush1.msra.mxu0 0.0
  %161 = vmatprep.subr.mxu0 0.0
  %162 = vmatpush1.msra.mxu0 0.0
  %163 = vmatprep.subr.mxu0 0.0
  %164 = vmatpush1.msra.mxu0 0.0
  %165 = vmatprep.subr.mxu0 0.0
  %166 = vmatpush1.msra.mxu0 0.0
  %167 = vmatprep.subr.mxu0 0.0
  %168 = vmatpush1.msra.mxu0 0.0
  %169 = vmatprep.subr.mxu0 0.0
  %170 = vmatpush1.msra.mxu0 0.0
  %171 = vmatprep.subr.mxu0 0.0
  %172 = vmatpush1.msra.mxu0 0.0
  %173 = vmatprep.subr.mxu0 0.0
  %174 = vmatpush1.msra.mxu0 0.0
  %175 = vmatprep.subr.mxu0 0.0
  %176 = vmatpush1.msra.mxu0 0.0
  %177 = vmatprep.subr.mxu0 0.0
  %178 = vmatpush1.msra.mxu0 0.0
  %179 = vmatprep.subr.mxu0 0.0
  %180 = vmatpush1.msra.mxu0 0.0
  %181 = vmatprep.subr.mxu0 0.0
  %182 = vmatpush1.msra.mxu0 0.0
  %183 = vmatprep.subr.mxu0 0.0
  %184 = vmatpush1.msra.mxu0 0.0
  %185 = vmatprep.subr.mxu0 0.0
  %186 = vmatpush1.msra.mxu0 0.0
  %187 = vmatprep.subr.mxu0 0.0
  %188 = vmatpush1.msra.mxu0 0.0
  %189 = vmatprep.subr.mxu0 0.0
  %190 = vmatpush1.msra.mxu0 0.0
  %191 = vmatprep.subr.mxu0 0.0
  %192 = vmatpush1.msra.mxu0 0.0
  %193 = vmatprep.subr.mxu0 0.0
  %194 = vmatpush1.msra.mxu0 0.0
  %195 = vmatprep.mubr.f32.mxu0 0.0
  %196 = vmatmul.mubr.f32.gmra.mrb[0].mxu0 %v125
  %v197 = vpop.f32.mrb[0].mxu0
  %v198 = vadd.f32 %v121, %v197
  %v199 = vpop.f32.mrb[0].mxu0
  %200 = vdwg.mxu0
  %vm201 = vcmask 7168
  %202 = vst.msk [vmem:[%s5] sm:$0xff] %vm201, %v198
  // Predicated region
  $region22: #{sigmoid_class1_forward.1} parent=0 // pred_check
    _
  $region23: #{sigmoid_class1_forward.1} parent=0 // pred_check_branch
    %204 = sbr.rel (0) target = $region25
  $region24: #{sigmoid_class1_forward.1} parent=0 // pred_region
    _
  $region25: #{sigmoid_class1_forward.1} parent=0 // pred_fallthru
    _
  // Predicated region
  $region26: #{sigmoid_class1_forward.1} parent=0 // pred_check
    _
  $region27: #{sigmoid_class1_forward.1} parent=0 // pred_check_branch
    %206 = sbr.rel (0) target = $region29
  $region28: #{sigmoid_class1_forward.1} parent=0 // pred_region
    _
  $region29: #{sigmoid_class1_forward.1} parent=0 // pred_fallthru
    _

</llo_original>
